<compile_context>
chip_gen: v7x
topology: tpu7x:2x2x1
jax: 0.10.0
libtpu: 0.0.40
codegen_flags: <defaults>
</compile_context>

<pallas_src>
import functools
import math

import jax
import jax.numpy as jnp
from jax.experimental import pallas as pl
from jax.experimental.pallas import tpu as pltpu


def _arcface_kernel(tgt_ref, out_ref, loss_ref, m_ref, l_ref, tacc_ref,
                    *, cos_m, sin_m, scale):
    j = pl.program_id(1)                     # class-tile index (reduction axis)
    nj = pl.num_programs(1)

    @pl.when(j == 0)
    def _():
        m_ref[...] = jnp.full(m_ref.shape, -jnp.inf, jnp.float32)
        l_ref[...] = jnp.zeros(l_ref.shape, jnp.float32)
        tacc_ref[...] = jnp.zeros(tacc_ref.shape, jnp.float32)

    x = out_ref[...].astype(jnp.float32)     # (TM, TC) cosine logits (f32 math)
    t = tgt_ref[...]                         # (TM, 1) int32 labels
    tm, tc = x.shape

    # hit[r, c] == True iff global class (j*TC + c) is row r's target.
    lane = jax.lax.broadcasted_iota(jnp.int32, (tm, tc), 1)
    t_local = t - j * tc                     # (TM, 1)
    hit = lane == t_local                    # (TM, TC) bool

    # Target cosine inside this class tile (0 when the target lives elsewhere).
    orig = jnp.sum(jnp.where(hit, x, 0.0), axis=-1, keepdims=True)      # (TM,1)
    o = orig * jnp.float32(0.999999)
    # cos(acos(o) + m) == o*cos(m) - sqrt(1 - o^2)*sin(m)   (no acos/cos lowering)
    marginal = (o * jnp.float32(cos_m)
                - jnp.sqrt(jnp.maximum(jnp.float32(1.0) - o * o,
                                       jnp.float32(0.0))) * jnp.float32(sin_m))
    diff = marginal - o                      # (TM, 1)

    # Margin-adjusted, scaled logits for this class tile.
    logits = jnp.float32(scale) * jnp.where(hit, x + diff, x)           # (TM,TC)

    # Accumulate the adjusted target logit analytically (exactly one class tile
    # per row contains the target) -- no second (TM,TC) multiply + reduce.
    row_has = jnp.logical_and(t_local >= 0, t_local < tc)               # (TM,1)
    tacc_ref[...] += jnp.where(row_has,
                               jnp.float32(scale) * (orig + diff),
                               jnp.float32(0.0))

    # Online (flash-style) logsumexp across class tiles.
    m_prev = m_ref[...]
    m_new = jnp.maximum(m_prev, jnp.max(logits, axis=-1, keepdims=True))
    l_ref[...] = (jnp.exp(m_prev - m_new) * l_ref[...]
                  + jnp.sum(jnp.exp(logits - m_new), axis=-1, keepdims=True))
    m_ref[...] = m_new

    @pl.when(j == nj - 1)
    def _():
        # Per-row CE = lse - target_logit; sum over the row tile and emit the
        # tile total broadcast over a lane-dense (1, 8, 128) output slab.
        per_row = m_ref[...] + jnp.log(l_ref[...]) - tacc_ref[...]      # (TM,1)
        tile_sum = jnp.sum(per_row, axis=0, keepdims=True)              # (1,1)
        loss_ref[...] = jnp.broadcast_to(tile_sum[None], loss_ref.shape)


def _pick_tile(full, target, unit):
    """Largest divisor of `full` that is a multiple of `unit` and <= target.
    Falls back to `full` (block == whole dim is always layout-legal)."""
    best, found, d = full, False, unit
    cap = min(target, full)
    while d <= cap:
        if full % d == 0:
            best, found = d, True
        d += unit
    return best if found else full


def arcface_loss(outputs, targets, *, margin=0.5, scale=64.0,
                 tile_rows=None, tile_classes=None):
    """ArcFace loss matching the PyTorch module forward (mean reduction)."""
    n, c = outputs.shape
    if tile_rows is None:
        tile_rows = _pick_tile(n, 256, 8)        # big row tiles amortize grid cost
    if tile_classes is None:
        tile_classes = _pick_tile(c, 2048, 128)  # lane-dense class tiles
    assert n % tile_rows == 0 and c % tile_classes == 0

    n_row_tiles = n // tile_rows
    n_cls_tiles = c // tile_classes
    tgt2d = targets.astype(jnp.int32).reshape(n, 1)

    # Raise the scoped-VMEM cap only when the double-buffered blocks need it
    # (defaults: 16 MiB v5e / 32 MiB v6e,v7x); keep headroom below v7x's 64 MiB.
    block_bytes = tile_rows * tile_classes * jnp.dtype(outputs.dtype).itemsize
    vmem_need = (2 * block_bytes + 2 * tile_rows * 4
                 + 2 * 8 * 128 * 4 + 3 * tile_rows * 4)
    vmem_limit = None
    if vmem_need > 12 * 1024 * 1024:
        vmem_limit = int(min(2 * vmem_need + (4 << 20), 56 * 1024 * 1024))

    kernel = functools.partial(
        _arcface_kernel,
        cos_m=math.cos(float(margin)),
        sin_m=math.sin(float(margin)),
        scale=float(scale))

    partials = pl.pallas_call(
        kernel,
        out_shape=jax.ShapeDtypeStruct((n_row_tiles, 8, 128), jnp.float32),
        grid_spec=pltpu.PrefetchScalarGridSpec(
            num_scalar_prefetch=0,
            grid=(n_row_tiles, n_cls_tiles),            # reduction axis last
            in_specs=[
                pl.BlockSpec((tile_rows, 1), lambda i, j: (i, 0)),
                pl.BlockSpec((tile_rows, tile_classes), lambda i, j: (i, j)),
            ],
            out_specs=pl.BlockSpec((1, 8, 128), lambda i, j: (i, 0, 0)),
            scratch_shapes=[
                pltpu.VMEM((tile_rows, 1), jnp.float32),   # running row max m
                pltpu.VMEM((tile_rows, 1), jnp.float32),   # running exp-sum l
                pltpu.VMEM((tile_rows, 1), jnp.float32),   # target-logit acc
            ],
        ),
        compiler_params=pltpu.CompilerParams(
            dimension_semantics=("parallel", "arbitrary"),
            vmem_limit_bytes=vmem_limit),
    )(tgt2d, outputs)

    # Glue: finish the batch mean (CrossEntropyLoss default reduction).
    return jnp.sum(partials[:, 0, 0]) / jnp.float32(n)


def _reference(outputs, targets, margin=0.5, scale=64.0):
    """Pure-JAX reference mirroring the PyTorch forward, for sanity check."""
    n, c = outputs.shape
    one_hot = jax.nn.one_hot(targets, c, dtype=outputs.dtype)
    orig = jnp.take_along_axis(outputs, targets[:, None], axis=1) * 0.999999
    marginal = jnp.cos(jnp.arccos(orig) + margin)
    diff = marginal - orig
    logits = scale * (outputs + diff * one_hot)
    logp = jax.nn.log_softmax(logits, axis=-1)
    return -jnp.mean(jnp.sum(logp * one_hot, axis=-1))


if __name__ == "__main__":
    key = jax.random.PRNGKey(0)
    k1, k2 = jax.random.split(key)

    N, C = 48, 256  # small demo shapes; cosine-like logits in (-1, 1)
    outputs = jax.random.uniform(k1, (N, C), jnp.float32,
                                 minval=-0.95, maxval=0.95)
    targets = jax.random.randint(k2, (N,), 0, C, dtype=jnp.int32)

    ref = _reference(outputs, targets)

    # Explicit small tiles: exercises multi row-tile grid AND the online
    # class-tiled logsumexp path (grid = (3, 2)).
    loss_tiled = jax.block_until_ready(
        arcface_loss(outputs, targets, margin=0.5, scale=64.0,
                     tile_rows=16, tile_classes=128))
    # Auto-picked (largest legal) tiles: single-block path.
    loss_auto = jax.block_until_ready(
        arcface_loss(outputs, targets, margin=0.5, scale=64.0))

    assert jnp.allclose(loss_tiled, ref, rtol=1e-4, atol=1e-4), (loss_tiled, ref)
    assert jnp.allclose(loss_auto, ref, rtol=1e-4, atol=1e-4), (loss_auto, ref)

    print("KERNEL_OK")
</pallas_src>

<mosaic_0001>
module attributes {stable_mosaic.version = 11 : i64} {
  func.func @_arcface_kernel(%arg0: i32, %arg1: i32, %arg2: memref<16x1xi32, #tpu.memory_space<vmem>>, %arg3: memref<16x128xf32, #tpu.memory_space<vmem>>, %arg4: memref<1x8x128xf32, #tpu.memory_space<vmem>>, %arg5: memref<16x1xf32, #tpu.memory_space<vmem>>, %arg6: memref<16x1xf32, #tpu.memory_space<vmem>>, %arg7: memref<16x1xf32, #tpu.memory_space<vmem>>) attributes {dimension_semantics = [#tpu.dimension_semantics<parallel>, #tpu.dimension_semantics<arbitrary>], iteration_bounds = array<i64: 3, 2>, scalar_prefetch = 0 : i64, scratch_operands = 3 : i64, tpu.core_type = #tpu.core_type<tc>, window_params = [{transform_indices = @transform_0, window_bounds = array<i64: 16, 1>}, {transform_indices = @transform_1, window_bounds = array<i64: 16, 128>}, {transform_indices = @transform_2, window_bounds = array<i64: 1, 8, 128>}]} {
    %c0_i32 = arith.constant 0 : i32
    %0 = arith.cmpi eq, %arg1, %c0_i32 : i32
    %1 = arith.extui %0 : i1 to i32
    %c0_i32_0 = arith.constant 0 : i32
    %2 = arith.cmpi ne, %1, %c0_i32_0 : i32
    scf.if %2 {
      %cst_30 = arith.constant 0xFF800000 : f32
      %66 = vector.broadcast %cst_30 : f32 to vector<16x1xf32>
      %c0_31 = arith.constant 0 : index
      %c0_32 = arith.constant 0 : index
      %67 = vector.load %arg5[%c0_31, %c0_32] : memref<16x1xf32, #tpu.memory_space<vmem>>, vector<16x1xf32>
      tpu.vector_store %arg5[%c0_31, %c0_32], %66 {strides = array<i32>} : memref<16x1xf32, #tpu.memory_space<vmem>>, vector<16x1xf32>,
      %cst_33 = arith.constant 0.000000e+00 : f32
      %68 = vector.broadcast %cst_33 : f32 to vector<16x1xf32>
      %c0_34 = arith.constant 0 : index
      %c0_35 = arith.constant 0 : index
      %69 = vector.load %arg6[%c0_34, %c0_35] : memref<16x1xf32, #tpu.memory_space<vmem>>, vector<16x1xf32>
      tpu.vector_store %arg6[%c0_34, %c0_35], %68 {strides = array<i32>} : memref<16x1xf32, #tpu.memory_space<vmem>>, vector<16x1xf32>,
      %cst_36 = arith.constant 0.000000e+00 : f32
      %70 = vector.broadcast %cst_36 : f32 to vector<16x1xf32>
      %c0_37 = arith.constant 0 : index
      %c0_38 = arith.constant 0 : index
      %71 = vector.load %arg7[%c0_37, %c0_38] : memref<16x1xf32, #tpu.memory_space<vmem>>, vector<16x1xf32>
      tpu.vector_store %arg7[%c0_37, %c0_38], %70 {strides = array<i32>} : memref<16x1xf32, #tpu.memory_space<vmem>>, vector<16x1xf32>,
    } else {
    }
    %c0 = arith.constant 0 : index
    %c0_1 = arith.constant 0 : index
    %3 = vector.load %arg3[%c0, %c0_1] : memref<16x128xf32, #tpu.memory_space<vmem>>, vector<16x128xf32>
    %c0_2 = arith.constant 0 : index
    %c0_3 = arith.constant 0 : index
    %4 = vector.load %arg2[%c0_2, %c0_3] : memref<16x1xi32, #tpu.memory_space<vmem>>, vector<16x1xi32>
    %5 = tpu.iota {dimensions = array<i32: 1>} : vector<16x128xi32>
    %c128_i32 = arith.constant 128 : i32
    %6 = arith.muli %arg1, %c128_i32 : i32
    %7 = vector.broadcast %6 : i32 to vector<16x1xi32>
    %8 = arith.subi %4, %7 : vector<16x1xi32>
    %9 = vector.broadcast %8 : vector<16x1xi32> to vector<16x128xi32>
    %10 = arith.cmpi eq, %5, %9 : vector<16x128xi32>
    %cst = arith.constant 0.000000e+00 : f32
    %11 = vector.broadcast %cst : f32 to vector<16x128xf32>
    %12 = arith.select %10, %3, %11 : vector<16x128xi1>, vector<16x128xf32>
    %cst_4 = arith.constant dense<0.000000e+00> : vector<16xf32>
    %13 = vector.multi_reduction <add>, %12, %cst_4 [1] : vector<16x128xf32> to vector<16xf32>
    %14 = vector.shape_cast %13 : vector<16xf32> to vector<16x1xf32>
    %cst_5 = arith.constant 0.999998986 : f32
    %15 = vector.broadcast %cst_5 : f32 to vector<16x1xf32>
    %16 = arith.mulf %14, %15 : vector<16x1xf32>
    %cst_6 = arith.constant 0.87758255 : f32
    %17 = vector.broadcast %cst_6 : f32 to vector<16x1xf32>
    %18 = arith.mulf %16, %17 : vector<16x1xf32>
    %19 = arith.mulf %16, %16 : vector<16x1xf32>
    %cst_7 = arith.constant 1.000000e+00 : f32
    %20 = vector.broadcast %cst_7 : f32 to vector<16x1xf32>
    %21 = arith.subf %20, %19 : vector<16x1xf32>
    %cst_8 = arith.constant 0.000000e+00 : f32
    %22 = vector.broadcast %cst_8 : f32 to vector<16x1xf32>
    %23 = arith.maximumf %21, %22 : vector<16x1xf32>
    %24 = math.sqrt %23 : vector<16x1xf32>
    %cst_9 = arith.constant 0.47942555 : f32
    %25 = vector.broadcast %cst_9 : f32 to vector<16x1xf32>
    %26 = arith.mulf %24, %25 : vector<16x1xf32>
    %27 = arith.subf %18, %26 : vector<16x1xf32>
    %28 = arith.subf %27, %16 : vector<16x1xf32>
    %29 = vector.broadcast %28 : vector<16x1xf32> to vector<16x128xf32>
    %30 = arith.addf %3, %29 : vector<16x128xf32>
    %31 = arith.select %10, %30, %3 : vector<16x128xi1>, vector<16x128xf32>
    %cst_10 = arith.constant 6.400000e+01 : f32
    %32 = vector.broadcast %cst_10 : f32 to vector<16x128xf32>
    %33 = arith.mulf %32, %31 : vector<16x128xf32>
    %c0_i32_11 = arith.constant 0 : i32
    %34 = vector.broadcast %c0_i32_11 : i32 to vector<16x1xi32>
    %35 = arith.cmpi sge, %8, %34 : vector<16x1xi32>
    %c128_i32_12 = arith.constant 128 : i32
    %36 = vector.broadcast %c128_i32_12 : i32 to vector<16x1xi32>
    %37 = arith.cmpi slt, %8, %36 : vector<16x1xi32>
    %38 = arith.andi %35, %37 : vector<16x1xi1>
    %c0_13 = arith.constant 0 : index
    %c0_14 = arith.constant 0 : index
    %39 = vector.load %arg7[%c0_13, %c0_14] : memref<16x1xf32, #tpu.memory_space<vmem>>, vector<16x1xf32>
    %40 = arith.addf %14, %28 : vector<16x1xf32>
    %cst_15 = arith.constant 6.400000e+01 : f32
    %41 = vector.broadcast %cst_15 : f32 to vector<16x1xf32>
    %42 = arith.mulf %41, %40 : vector<16x1xf32>
    %cst_16 = arith.constant 0.000000e+00 : f32
    %43 = vector.broadcast %cst_16 : f32 to vector<16x1xf32>
    %44 = arith.select %38, %42, %43 : vector<16x1xi1>, vector<16x1xf32>
    %45 = arith.addf %39, %44 : vector<16x1xf32>
    %c0_17 = arith.constant 0 : index
    %c0_18 = arith.constant 0 : index
    %46 = vector.load %arg7[%c0_17, %c0_18] : memref<16x1xf32, #tpu.memory_space<vmem>>, vector<16x1xf32>
    tpu.vector_store %arg7[%c0_17, %c0_18], %45 {strides = array<i32>} : memref<16x1xf32, #tpu.memory_space<vmem>>, vector<16x1xf32>,
    %c0_19 = arith.constant 0 : index
    %c0_20 = arith.constant 0 : index
    %47 = vector.load %arg5[%c0_19, %c0_20] : memref<16x1xf32, #tpu.memory_space<vmem>>, vector<16x1xf32>
    %cst_21 = arith.constant dense<0xFF800000> : vector<16xf32>
    %48 = vector.multi_reduction <maximumf>, %33, %cst_21 [1] : vector<16x128xf32> to vector<16xf32>
    %49 = vector.shape_cast %48 : vector<16xf32> to vector<16x1xf32>
    %50 = arith.maximumf %47, %49 : vector<16x1xf32>
    %51 = arith.subf %47, %50 : vector<16x1xf32>
    %52 = math.exp %51 : vector<16x1xf32>
    %c0_22 = arith.constant 0 : index
    %c0_23 = arith.constant 0 : index
    %53 = vector.load %arg6[%c0_22, %c0_23] : memref<16x1xf32, #tpu.memory_space<vmem>>, vector<16x1xf32>
    %54 = arith.mulf %52, %53 : vector<16x1xf32>
    %55 = vector.broadcast %50 : vector<16x1xf32> to vector<16x128xf32>
    %56 = arith.subf %33, %55 : vector<16x128xf32>
    %57 = math.exp %56 : vector<16x128xf32>
    %cst_24 = arith.constant dense<0.000000e+00> : vector<16xf32>
    %58 = vector.multi_reduction <add>, %57, %cst_24 [1] : vector<16x128xf32> to vector<16xf32>
    %59 = vector.shape_cast %58 : vector<16xf32> to vector<16x1xf32>
    %60 = arith.addf %54, %59 : vector<16x1xf32>
    %c0_25 = arith.constant 0 : index
    %c0_26 = arith.constant 0 : index
    %61 = vector.load %arg6[%c0_25, %c0_26] : memref<16x1xf32, #tpu.memory_space<vmem>>, vector<16x1xf32>
    tpu.vector_store %arg6[%c0_25, %c0_26], %60 {strides = array<i32>} : memref<16x1xf32, #tpu.memory_space<vmem>>, vector<16x1xf32>,
    %c0_27 = arith.constant 0 : index
    %c0_28 = arith.constant 0 : index
    %62 = vector.load %arg5[%c0_27, %c0_28] : memref<16x1xf32, #tpu.memory_space<vmem>>, vector<16x1xf32>
    tpu.vector_store %arg5[%c0_27, %c0_28], %50 {strides = array<i32>} : memref<16x1xf32, #tpu.memory_space<vmem>>, vector<16x1xf32>,
    %c1_i32 = arith.constant 1 : i32
    %63 = arith.cmpi eq, %arg1, %c1_i32 : i32
    %64 = arith.extui %63 : i1 to i32
    %c0_i32_29 = arith.constant 0 : i32
    %65 = arith.cmpi ne, %64, %c0_i32_29 : i32
    scf.if %65 {
      %c0_30 = arith.constant 0 : index
      %c0_31 = arith.constant 0 : index
      %66 = vector.load %arg5[%c0_30, %c0_31] : memref<16x1xf32, #tpu.memory_space<vmem>>, vector<16x1xf32>
      %c0_32 = arith.constant 0 : index
      %c0_33 = arith.constant 0 : index
      %67 = vector.load %arg6[%c0_32, %c0_33] : memref<16x1xf32, #tpu.memory_space<vmem>>, vector<16x1xf32>
      %68 = math.log %67 : vector<16x1xf32>
      %69 = arith.addf %66, %68 : vector<16x1xf32>
      %c0_34 = arith.constant 0 : index
      %c0_35 = arith.constant 0 : index
      %70 = vector.load %arg7[%c0_34, %c0_35] : memref<16x1xf32, #tpu.memory_space<vmem>>, vector<16x1xf32>
      %71 = arith.subf %69, %70 : vector<16x1xf32>
      %cst_36 = arith.constant dense<0.000000e+00> : vector<1xf32>
      %72 = vector.multi_reduction <add>, %71, %cst_36 [0] : vector<16x1xf32> to vector<1xf32>
      %73 = vector.shape_cast %72 : vector<1xf32> to vector<1x1xf32>
      %74 = vector.shape_cast %73 : vector<1x1xf32> to vector<1x1x1xf32>
      %75 = vector.shape_cast %74 : vector<1x1x1xf32> to vector<1x1x1xf32>
      %76 = vector.broadcast %75 : vector<1x1x1xf32> to vector<1x8x128xf32>
      %c0_37 = arith.constant 0 : index
      %c0_38 = arith.constant 0 : index
      %c0_39 = arith.constant 0 : index
      %77 = vector.load %arg4[%c0_37, %c0_38, %c0_39] : memref<1x8x128xf32, #tpu.memory_space<vmem>>, vector<1x8x128xf32>
      tpu.vector_store %arg4[%c0_37, %c0_38, %c0_39], %76 {strides = array<i32>} : memref<1x8x128xf32, #tpu.memory_space<vmem>>, vector<1x8x128xf32>,
    } else {
    }
    return
  }
  func.func @transform_0(%arg0: i32, %arg1: i32) -> (i32, i32) {
    %c0_i32 = arith.constant 0 : i32
    %c0_i32_0 = arith.constant 0 : i32
    return %arg0, %c0_i32 : i32, i32
  }
  func.func @transform_1(%arg0: i32, %arg1: i32) -> (i32, i32) {
    %c0_i32 = arith.constant 0 : i32
    return %arg0, %arg1 : i32, i32
  }
  func.func @transform_2(%arg0: i32, %arg1: i32) -> (i32, i32, i32) {
    %c0_i32 = arith.constant 0 : i32
    %c0_i32_0 = arith.constant 0 : i32
    %c0_i32_1 = arith.constant 0 : i32
    return %arg0, %c0_i32, %c0_i32_0 : i32, i32, i32
  }
}

</mosaic_0001>

<llo_original>
// kernel: tpu_custom_call.1
$region0: #{tpu_custom_call.1}
  #allocation0 [shape = 'u32[]', space=smem, size = 0x4, offset = 0x4, fixed_abs, tag = 'smem constant byte address 0x4 - core index']
  #allocation1 [shape = 'u32[144,128]{1,0:T(1,128)}', space=vmem, size = 0x12000, scoped, tag = 'internal scratch']
  #allocation2 [shape = 'f32[16,1]{1,0:T(8,128)}', space=vmem, size = 0x2000, scoped, tag = 'scratch operand']
  #allocation3 [shape = 'f32[16,1]{1,0:T(8,128)}', space=vmem, size = 0x2000, scoped, tag = 'scratch operand']
  #allocation4 [shape = 'f32[16,1]{1,0:T(8,128)}', space=vmem, size = 0x2000, scoped, tag = 'scratch operand']
  %s0 = inlined_call_operand.vmem [shape: s32[48,1], index: 0, kind: input, shape index: {}]
  %s1 = inlined_call_operand.hbm [shape: f32[48,256], index: 1, kind: input, shape index: {}]
  %s2 = inlined_call_operand.hbm [shape: f32[3,8,128], index: 2, kind: output, shape index: {}]
  %s3 = sld [smem:[#allocation0]]
  $region53: #{tpu_custom_call.1} parent=0
    _
  %s5 = ssub.s32 1, %s3
  %s6 = scalar_select 0, %s5, %s3
  $region1: #{tpu_custom_call.1} parent=0
    #allocation5 [shape = 'u8[16384]{0}', space=vmem, size = 0x4000, scoped, tag = 'input window, operand 1']
    #allocation6 [shape = 's32[2]{0}', space=sflag, size = 0x8, scoped, tag = 'scoped memory for tpu_custom_call.1']
    #allocation7 [shape = 's32[2]{0}', space=sflag, size = 0x8, scoped, tag = 'scoped memory for tpu_custom_call.1']
    #allocation8 [shape = 'u8[8192]{0}', space=vmem, size = 0x2000, scoped, tag = 'output window, operand 0']
    %7 = vsyncpa [#allocation6], 0
    %s8 = scalar_lea.sflag [#allocation6], 1
    %9 = vsyncpa %s8, 0
    %10 = vsyncpa [#allocation7], 0
    %s11 = scalar_lea.sflag [#allocation7], 1
    %12 = vsyncpa %s11, 0
    loop: start=0, step=1, limit=8
    $region2: #{tpu_custom_call.1} parent=1 // loop_pre_header
      _
    $region3: #{tpu_custom_call.1} parent=1 // loop_header
      %s14 = sphi 0, %s18
      %p15 = scmp.ge.s32.totalorder %s14, 8
      %s21 = sphi 0, %s33
      %s22 = sphi 0, %s29
      %s23 = sphi 0, %s21
      %s24 = sphi 0, %s22
      %s25 = sphi 0, %s23
      %s26 = sphi 0, %s24
      %s36 = sphi 0, %s38
      %s39 = sphi 0, %s36
      %s40 = sphi 0, %s39
      %s56 = sphi 0, %s40
      %s64 = sphi 0, %s66
      %s67 = sphi 0, %s64
      %s68 = sphi 0, %s67
      %s84 = sphi 0, %s68
      %s90 = sphi 0, %s92
      %s93 = sphi 0, %s90
      %s94 = sphi 0, %s93
      %s110 = sphi 0, %s94
    $region4: #{tpu_custom_call.1} parent=1 // loop_header_branch
      %17 = sbr.rel (%p15) target = $region8
    $region5: #{tpu_custom_call.1} parent=1 // loop_body
      %s19 = ssub.s32 %s14, 1
      %s20 = ssub.s32 %s14, 2
      %s27 = sadd.s32 1, %s22
      %p28 = scmp.ge.s32.totalorder %s27, 2
      %s29 = scalar_select %p28, 0, %s27
      %s30 = sadd.s32 1, %s21
      %s31 = scalar_select %p28, %s30, %s21
      %p32 = scmp.ge.s32.totalorder %s31, 3
      %s33 = scalar_select %p32, 0, %s31
      %s34 = ssub.s32 %s21, %s33
      %p35 = scmp.eq.s32.totalorder %s34, 0
      %s37 = sadd.s32 %s36, 1
      %s38 = scalar_select %p35, %s36, %s37
      %p41 = pneg %p35
      %p42 = scmp.eq.s32.totalorder %s14, 5
      %p43 = por %p41, %p42
      %p44 = scmp.ne.s32.totalorder %s36, %s39
      %p45 = scmp.eq.s32.totalorder %s14, 0
      %p46 = por %p44, %p45
      %p47 = scmp.ne.s32.totalorder %s36, %s39
      %p48 = scmp.eq.s32.totalorder %s19, 5
      %p49 = por %p47, %p48
      %p50 = scmp.ne.s32.totalorder %s39, %s40
      %p51 = scmp.eq.s32.totalorder %s19, 0
      %p52 = por %p50, %p51
      %p53 = scmp.ne.s32.totalorder %s39, %s40
      %p54 = scmp.eq.s32.totalorder %s20, 5
      %p55 = por %p53, %p54
      %p57 = scmp.ne.s32.totalorder %s40, %s56
      %p58 = scmp.eq.s32.totalorder %s20, 0
      %p59 = por %p57, %p58
      %s60 = ssub.s32 %s21, %s33
      %s61 = ssub.s32 %s22, %s29
      %s62 = sor.u32 %s60, %s61
      %p63 = scmp.eq.s32.totalorder %s62, 0
      %s65 = sadd.s32 %s64, 1
      %s66 = scalar_select %p63, %s64, %s65
      %p69 = pneg %p63
      %p70 = scmp.eq.s32.totalorder %s14, 5
      %p71 = por %p69, %p70
      %p72 = scmp.ne.s32.totalorder %s64, %s67
      %p73 = scmp.eq.s32.totalorder %s14, 0
      %p74 = por %p72, %p73
      %p75 = scmp.ne.s32.totalorder %s64, %s67
      %p76 = scmp.eq.s32.totalorder %s19, 5
      %p77 = por %p75, %p76
      %p78 = scmp.ne.s32.totalorder %s67, %s68
      %p79 = scmp.eq.s32.totalorder %s19, 0
      %p80 = por %p78, %p79
      %p81 = scmp.ne.s32.totalorder %s67, %s68
      %p82 = scmp.eq.s32.totalorder %s20, 5
      %p83 = por %p81, %p82
      %p85 = scmp.ne.s32.totalorder %s68, %s84
      %p86 = scmp.eq.s32.totalorder %s20, 0
      %p87 = por %p85, %p86
      %s88 = ssub.s32 %s21, %s33
      %p89 = scmp.eq.s32.totalorder %s88, 0
      %s91 = sadd.s32 %s90, 1
      %s92 = scalar_select %p89, %s90, %s91
      %p95 = pneg %p89
      %p96 = scmp.eq.s32.totalorder %s14, 5
      %p97 = por %p95, %p96
      %p98 = scmp.ne.s32.totalorder %s90, %s93
      %p99 = scmp.eq.s32.totalorder %s14, 0
      %p100 = por %p98, %p99
      %p101 = scmp.ne.s32.totalorder %s90, %s93
      %p102 = scmp.eq.s32.totalorder %s19, 5
      %p103 = por %p101, %p102
      %p104 = scmp.ne.s32.totalorder %s93, %s94
      %p105 = scmp.eq.s32.totalorder %s19, 0
      %p106 = por %p104, %p105
      %p107 = scmp.ne.s32.totalorder %s93, %s94
      %p108 = scmp.eq.s32.totalorder %s20, 5
      %p109 = por %p107, %p108
      %p111 = scmp.ne.s32.totalorder %s94, %s110
      %p112 = scmp.eq.s32.totalorder %s20, 0
      %p113 = por %p111, %p112
      %p114 = scmp.le.s32.totalorder 1, %s14
      %p115 = scmp.lt.s32.totalorder %s14, 7
      %p116 = pnand %p114, %p115
      %p117 = pneg %p116
      // Predicated region
      $region9: #{tpu_custom_call.1} parent=5 // pred_check
        _
      $region10: #{tpu_custom_call.1} parent=5 // pred_check_branch
        %119 = sbr.rel (%p116) target = $region12
      $region11: #{tpu_custom_call.1} parent=5 // pred_region
        %s120 = ssub.s32 %s14, 1
      $region12: #{tpu_custom_call.1} parent=5 // pred_fallthru
        _
      %p121 = scmp.lt.s32.totalorder %s14, 6
      // Predicated region
      $region13: #{tpu_custom_call.1} parent=5 // pred_check
        %p122 = pneg %p121
      $region14: #{tpu_custom_call.1} parent=5 // pred_check_branch
        %124 = sbr.rel (%p122) target = $region16
      $region15: #{tpu_custom_call.1} parent=5 // pred_region
        // Predicated region
        $region17: #{tpu_custom_call.1} parent=15 // pred_check
          %p125 = pneg %p46
        $region18: #{tpu_custom_call.1} parent=15 // pred_check_branch
          %127 = sbr.rel (%p125) target = $region20
        $region19: #{tpu_custom_call.1} parent=15 // pred_region
          %s128 = smul.u32 2, %s21
          %p129 = scmp.lt.s32.totalorder %s128, 5
          %s130 = scalar_select %p129, %s128, 5
          %s131 = smul.addr %s130, 8
          %s132 = scalar_lea.vmem %s0, %s131
          %s133 = smul.u32 2, %s21
        $region20: #{tpu_custom_call.1} parent=15 // pred_fallthru
          _
        // Predicated region
        $region21: #{tpu_custom_call.1} parent=15 // pred_check
          %p134 = pneg %p74
        $region22: #{tpu_custom_call.1} parent=15 // pred_check_branch
          %136 = sbr.rel (%p134) target = $region24
        $region23: #{tpu_custom_call.1} parent=15 // pred_region
          %s137 = sand.u32 %s64, 1
          %s138 = scalar_lea.sflag [#allocation6], %s137
          %s139 = sand.u32 %s64, 1
          %s140 = smul.addr %s139, 16
          %s141 = scalar_lea.vmem [#allocation5], %s140
          %s142 = smul.u32 2, %s21
          %s144 = ssub.s32 256, 256
          %145 = vsyncadd %s138, %s144
          %s146 = smul.addr %s142, 2
          %s147 = sadd.s32 %s22, %s146
          %s148 = smul.addr %s147, 128
          %s149 = scalar_lea.hbm %s1, %s148
          %s150 = sshll.u32 %s141, 4
          %s151 = int_to_ptr.vmem [resolvable:$true] %s150
          %156 = dma.hbm_to_vmem [thread:$0]  %s149, 256, %s151, %s138, 256, 128, 8
        $region24: #{tpu_custom_call.1} parent=15 // pred_fallthru
          _
      $region16: #{tpu_custom_call.1} parent=5 // pred_fallthru
        _
      %p157 = scmp.le.s32.totalorder 1, %s14
      %p158 = scmp.lt.s32.totalorder %s14, 7
      %p159 = pnand %p157, %p158
      %p160 = pneg %p159
      // Predicated region
      $region25: #{tpu_custom_call.1} parent=5 // pred_check
        _
      $region26: #{tpu_custom_call.1} parent=5 // pred_check_branch
        %162 = sbr.rel (%p159) target = $region28
      $region27: #{tpu_custom_call.1} parent=5 // pred_region
        %s163 = ssub.s32 %s14, 1
        %s164 = sand.u32 %s67, 1
        %s165 = scalar_lea.sflag [#allocation6], %s164
        %s166 = sand.u32 %s67, 1
        %s167 = smul.addr %s166, 16
        %s168 = scalar_lea.vmem [#allocation5], %s167
        // Predicated region
        $region29: #{tpu_custom_call.1} parent=27 // pred_check
          %p169 = pneg %p80
        $region30: #{tpu_custom_call.1} parent=27 // pred_check_branch
          %171 = sbr.rel (%p169) target = $region32
        $region31: #{tpu_custom_call.1} parent=27 // pred_region
          %172 = dma.done %s165, 256
        $region32: #{tpu_custom_call.1} parent=27 // pred_fallthru
          _
        %s173 = smul.u32 2, %s23
        %p174 = scmp.lt.s32.totalorder %s173, 5
        %s175 = scalar_select %p174, %s173, 5
        %s176 = smul.addr %s175, 8
        %s177 = scalar_lea.vmem %s0, %s176
        %p178 = pneg %p52
        %p179 = pneg %p49
        %s180 = sand.u32 %s67, 1
        %s181 = scalar_lea.sflag [#allocation6], %s180
        %s182 = sand.u32 %s67, 1
        %s183 = smul.addr %s182, 16
        %s184 = scalar_lea.vmem [#allocation5], %s183
        %p185 = pneg %p80
        %p186 = pneg %p77
        %p187 = pneg %p106
        %p188 = pneg %p103
        %s189 = sand.u32 %s93, 1
        %s190 = scalar_lea.sflag [#allocation7], %s189
        %s191 = sand.u32 %s93, 1
        %s192 = smul.addr %s191, 8
        %s193 = scalar_lea.vmem [#allocation8], %s192
        %s194 = smul.u32 2, %s23
        %p195 = scmp.lt.s32.totalorder %s194, 5
        %s196 = scalar_select %p195, %s194, 5
        %s197 = smul.addr %s196, 8
        %s198 = scalar_lea.vmem %s0, %s197
        %s199 = smul.u32 2, %s23
        %s200 = smul.u32 2, %s23
        %p201 = scmp.eq.s32.totalorder %s24, 0
        // Predicated region
        $region33: #{tpu_custom_call.1} parent=27 // pred_check
          %p202 = pneg %p201
        $region34: #{tpu_custom_call.1} parent=27 // pred_check_branch
          %204 = sbr.rel (%p202) target = $region36
        $region35: #{tpu_custom_call.1} parent=27 // pred_region
          %vm205 = vcmask 7168
          %206 = vst.msk [vmem:[#allocation2] sm:$0xff] %vm205, -inf
          %207 = vst.msk [vmem:[#allocation2 + $0x8] sm:$0xff] %vm205, -inf
          %208 = vst.msk [vmem:[#allocation3] sm:$0xff] %vm205, 0.0
          %209 = vst.msk [vmem:[#allocation3 + $0x8] sm:$0xff] %vm205, 0.0
          %210 = vst.msk [vmem:[#allocation4] sm:$0xff] %vm205, 0.0
          %211 = vst.msk [vmem:[#allocation4 + $0x8] sm:$0xff] %vm205, 0.0
        $region36: #{tpu_custom_call.1} parent=27 // pred_fallthru
          _
        %v212 = vld [vmem:[%s168] sm:$0xff]
        %v213 = vld [vmem:[%s168 + $0x8] sm:$0xff]
        %v214 = vld [vmem:[%s198] sm:$0xff]
        %v215 = vld [vmem:[%s198 + $0x8] sm:$0xff]
        %v216 = vlaneseq
        %v217 = vand.u32 %v216, 127
        %s218 = smul.u32 %s24, 128
        %v219 = vstv %s218
        %v220 = vsub.s32 %v214, %v219
        %v221 = vsub.s32 %v215, %v219
        %222 = vset.pattern.permute.xlu0 0
        %223 = vperm.xlu0 %222, %v220
        %v224 = vpop.permute.xlu0 %223
        %225 = vset.pattern.permute.xlu0 0
        %226 = vperm.xlu0 %225, %v221
        %v227 = vpop.permute.xlu0 %226
        %vm228 = vcmp.eq.s32.totalorder %v217, %v224
        %vm229 = vcmp.eq.s32.totalorder %v217, %v227
        %v230 = vsel %vm228, %v212, 0.0
        %v231 = vsel %vm229, %v213, 0.0
        %232 = vadd.xlane.f32.xlu0 %v230
        %v233 = vpop.xlane.xlu0 %232
        %234 = vadd.xlane.f32.xlu0 %v231
        %v235 = vpop.xlane.xlu0 %234
        %v236 = vmul.f32 %v233, 0.999999
        %v237 = vmul.f32 %v235, 0.999999
        %v238 = vmul.f32 %v236, 0.87758255
        %v239 = vmul.f32 %v237, 0.87758255
        %v240 = vmul.f32 %v236, %v236
        %v241 = vmul.f32 %v237, %v237
        %v242 = vsub.f32 1.0, %v240
        %v243 = vsub.f32 1.0, %v241
        %v244 = vmax.f32 %v242, 0.0
        %v245 = vmax.f32 %v243, 0.0
        %v246 = vrsqrt.pop %v244
        %v247 = vmul.f32 %v244, %v246
        %vm248 = vcmp.eq.f32.partialorder %v244, inf
        %v249 = vsel %vm248, %v244, %v247
        %vm250 = vcmp.eq.f32.partialorder %v244, 0.0
        %v251 = vand.u32 %v244, 2147483648
        %v252 = vsel %vm250, %v251, %v249
        %v253 = vrsqrt.pop %v245
        %v254 = vmul.f32 %v245, %v253
        %vm255 = vcmp.eq.f32.partialorder %v245, inf
        %v256 = vsel %vm255, %v245, %v254
        %vm257 = vcmp.eq.f32.partialorder %v245, 0.0
        %v258 = vand.u32 %v245, 2147483648
        %v259 = vsel %vm257, %v258, %v256
        %v260 = vmul.f32 %v252, 0.47942555
        %v261 = vmul.f32 %v259, 0.47942555
        %v262 = vsub.f32 %v238, %v260
        %v263 = vsub.f32 %v239, %v261
        %v264 = vsub.f32 %v262, %v236
        %v265 = vsub.f32 %v263, %v237
        %v266 = vadd.f32 %v212, %v264
        %v267 = vadd.f32 %v213, %v265
        %v268 = vsel %vm228, %v266, %v212
        %v269 = vsel %vm229, %v267, %v213
        %v270 = vmul.f32 %v268, 64.0
        %v271 = vmul.f32 %v269, 64.0
        %vm272 = vcmp.ge.s32.totalorder %v220, 0
        %vm273 = vcmp.ge.s32.totalorder %v221, 0
        %vm274 = vcmp.lt.s32.totalorder %v220, 128
        %vm275 = vcmp.lt.s32.totalorder %v221, 128
        %vm276 = vmand %vm272, %vm274
        %vm277 = vmand %vm273, %vm275
        %v278 = vld [vmem:[#allocation4] sm:$0xff]
        %v279 = vld [vmem:[#allocation4 + $0x8] sm:$0xff]
        %v280 = vadd.f32 %v233, %v264
        %v281 = vadd.f32 %v235, %v265
        %v282 = vmul.f32 %v280, 64.0
        %v283 = vmul.f32 %v281, 64.0
        %v284 = vsel %vm276, %v282, 0.0
        %v285 = vsel %vm277, %v283, 0.0
        %v286 = vadd.f32 %v278, %v284
        %v287 = vadd.f32 %v279, %v285
        %vm288 = vcmask 7168
        %289 = vst.msk [vmem:[#allocation4] sm:$0xff] %vm288, %v286
        %290 = vst.msk [vmem:[#allocation4 + $0x8] sm:$0xff] %vm288, %v287
        %v291 = vld [vmem:[#allocation2] sm:$0xff]
        %v292 = vld [vmem:[#allocation2 + $0x8] sm:$0xff]
        %293 = vmax.xlane.f32.xlu0 %v270
        %v294 = vpop.xlane.xlu0 %293
        %295 = vmax.xlane.f32.xlu0 %v271
        %v296 = vpop.xlane.xlu0 %295
        %v297 = vmax.f32 %v291, %v294
        %v298 = vmax.f32 %v292, %v296
        %v299 = vsub.f32 %v291, %v297
        %v300 = vsub.f32 %v292, %v298
        %v301 = vmul.f32 %v299, 1.442695
        %v302 = vpow.pop %v301
        %v303 = vmul.f32 %v300, 1.442695
        %v304 = vpow.pop %v303
        %v305 = vld [vmem:[#allocation3] sm:$0xff]
        %v306 = vld [vmem:[#allocation3 + $0x8] sm:$0xff]
        %v307 = vmul.f32 %v302, %v305
        %v308 = vmul.f32 %v304, %v306
        %310 = vset.pattern.permute.xlu0 0
        %311 = vperm.xlu0 %310, %v297
        %v312 = vpop.permute.xlu0 %311
        %315 = vset.pattern.permute.xlu0 0
        %316 = vperm.xlu0 %315, %v298
        %v317 = vpop.permute.xlu0 %316
        %v319 = vsub.f32 %v270, %v312
        %v320 = vsub.f32 %v271, %v317
        %v321 = vmul.f32 %v319, 1.442695
        %v322 = vpow.pop %v321
        %v323 = vmul.f32 %v320, 1.442695
        %v324 = vpow.pop %v323
        %325 = vadd.xlane.f32.xlu0 %v322
        %v326 = vpop.xlane.xlu0 %325
        %327 = vadd.xlane.f32.xlu0 %v324
        %v328 = vpop.xlane.xlu0 %327
        %v329 = vadd.f32 %v307, %v326
        %v330 = vadd.f32 %v308, %v328
        %331 = vst.msk [vmem:[#allocation3] sm:$0xff] %vm288, %v329
        %332 = vst.msk [vmem:[#allocation3 + $0x8] sm:$0xff] %vm288, %v330
        %333 = vst.msk [vmem:[#allocation2] sm:$0xff] %vm288, %v297
        %334 = vst.msk [vmem:[#allocation2 + $0x8] sm:$0xff] %vm288, %v298
        %p335 = scmp.eq.s32.totalorder %s24, 1
        // Predicated region
        $region37: #{tpu_custom_call.1} parent=27 // pred_check
          %p336 = pneg %p335
        $region38: #{tpu_custom_call.1} parent=27 // pred_check_branch
          %338 = sbr.rel (%p336) target = $region40
        $region39: #{tpu_custom_call.1} parent=27 // pred_region
          %v339 = vld [vmem:[#allocation2] sm:$0xff]
          %v340 = vld [vmem:[#allocation2 + $0x8] sm:$0xff]
          %v341 = vld [vmem:[#allocation3] sm:$0xff]
          %v342 = vld [vmem:[#allocation3 + $0x8] sm:$0xff]
          %v343 = vlog2.pop %v341
          %v344 = vmul.f32 %v343, 0.6931472
          %v345 = vlog2.pop %v342
          %v346 = vmul.f32 %v345, 0.6931472
          %v347 = vadd.f32 %v339, %v344
          %v348 = vadd.f32 %v340, %v346
          %v349 = vld [vmem:[#allocation4] sm:$0xff]
          %v350 = vld [vmem:[#allocation4 + $0x8] sm:$0xff]
          %v351 = vsub.f32 %v347, %v349
          %v352 = vsub.f32 %v348, %v350
          %v353 = vsel %vm288, %v351, 0.0
          %v354 = vsel %vm288, %v352, 0.0
          %v355 = vadd.f32 %v353, %v354
          %v356 = vrot.slane %v355, 4
          %v357 = vadd.f32 %v355, %v356
          %v358 = vrot.slane %v357, 2
          %v359 = vadd.f32 %v357, %v358
          %v360 = vrot.slane %v359, 1
          %v361 = vadd.f32 %v359, %v360
          %363 = vset.pattern.permute.xlu0 0
          %364 = vperm.xlu0 %363, %v361
          %v365 = vpop.permute.xlu0 %364
          %367 = vst [vmem:[%s193] sm:$0xff] %v365
        $region40: #{tpu_custom_call.1} parent=27 // pred_fallthru
          _
        %s368 = sand.u32 %s93, 1
        %s369 = scalar_lea.sflag [#allocation7], %s368
        %s370 = sand.u32 %s93, 1
        %s371 = smul.addr %s370, 8
        %s372 = scalar_lea.vmem [#allocation8], %s371
        // Predicated region
        $region41: #{tpu_custom_call.1} parent=27 // pred_check
          %p373 = pneg %p103
        $region42: #{tpu_custom_call.1} parent=27 // pred_check_branch
          %375 = sbr.rel (%p373) target = $region44
        $region43: #{tpu_custom_call.1} parent=27 // pred_region
          %s377 = ssub.s32 128, 128
          %378 = vsyncadd %s369, %s377
          %s379 = smul.addr %s23, 128
          %s380 = scalar_lea.hbm %s2, %s379
          %s382 = sshll.u32 %s372, 4
          %s383 = int_to_ptr.vmem [resolvable:$true] %s382
          %385 = dma.vmem_to_hbm [thread:$0]  %s383, 128, %s380, %s369
        $region44: #{tpu_custom_call.1} parent=27 // pred_fallthru
          _
      $region28: #{tpu_custom_call.1} parent=5 // pred_fallthru
        _
      %p386 = scmp.le.s32.totalorder 2, %s14
      // Predicated region
      $region45: #{tpu_custom_call.1} parent=5 // pred_check
        %p387 = pneg %p386
      $region46: #{tpu_custom_call.1} parent=5 // pred_check_branch
        %389 = sbr.rel (%p387) target = $region48
      $region47: #{tpu_custom_call.1} parent=5 // pred_region
        %s390 = ssub.s32 %s14, 2
        // Predicated region
        $region49: #{tpu_custom_call.1} parent=47 // pred_check
          %p391 = pneg %p109
        $region50: #{tpu_custom_call.1} parent=47 // pred_check_branch
          %393 = sbr.rel (%p391) target = $region52
        $region51: #{tpu_custom_call.1} parent=47 // pred_region
          %s394 = sand.u32 %s94, 1
          %s395 = scalar_lea.sflag [#allocation7], %s394
          %s396 = sand.u32 %s94, 1
          %s397 = smul.addr %s396, 8
          %s398 = scalar_lea.vmem [#allocation8], %s397
          %399 = dma.done %s395, 128
        $region52: #{tpu_custom_call.1} parent=47 // pred_fallthru
          _
      $region48: #{tpu_custom_call.1} parent=5 // pred_fallthru
        _
    $region6: #{tpu_custom_call.1} parent=1 // loop_footer
      %s18 = sadd.s32 1, %s14
    $region7: #{tpu_custom_call.1} parent=1 // loop_footer_branch
      %13 = sbr.rel target = $region3
    $region8: #{tpu_custom_call.1} parent=1 // loop_exit
      _
    %400 = vsyncpa [#allocation6], 1
    %s401 = scalar_lea.sflag [#allocation6], 1
    %402 = vsyncpa %s401, 1
    %403 = vsyncpa [#allocation7], 1
    %s404 = scalar_lea.sflag [#allocation7], 1
    %405 = vsyncpa %s404, 1

</llo_original>
